<compile_context>
chip_gen: v6e
topology: v6e:2x2x1
jax: 0.10.0
libtpu: 0.0.40
codegen_flags: <defaults>
</compile_context>

<pallas_src>
import functools

import jax
import jax.numpy as jnp
from jax.experimental import pallas as pl
from jax.experimental.pallas import tpu as pltpu


EPS = 1e-5  # nn.BatchNorm1d default eps


# --------------------------------------------------------------------------
# Stage 1: h = x @ W1 (bf16->f32 MXU) + global batch statistics.
# Emits the hidden activation and the folded BN affine (scale, shift).
# --------------------------------------------------------------------------
def _stage1_kernel(x_ref, w1_ref, gamma_ref, beta_ref,
                   h_ref, scale_ref, shift_ref,
                   sum_sc, sq_sc, *, batch_size):
    i = pl.program_id(0)

    @pl.when(i == 0)
    def _():
        sum_sc[...] = jnp.zeros_like(sum_sc)
        sq_sc[...] = jnp.zeros_like(sq_sc)

    # Linear 1 on the MXU. The b1 bias is intentionally omitted: training-mode
    # BatchNorm subtracts the batch mean, so a per-feature bias cancels exactly.
    h = jnp.dot(x_ref[...], w1_ref[...], preferred_element_type=jnp.float32)
    h_ref[...] = h

    # One-pass statistics: accumulate sum and sum-of-squares (XLU reductions).
    sum_sc[...] += jnp.sum(h, axis=0, keepdims=True)
    sq_sc[...] += jnp.sum(h * h, axis=0, keepdims=True)

    @pl.when(i == pl.num_programs(0) - 1)
    def _():
        inv_b = jnp.float32(1.0 / batch_size)
        mean = sum_sc[...] * inv_b
        var = sq_sc[...] * inv_b - mean * mean            # biased variance
        scale = gamma_ref[...] * jax.lax.rsqrt(var + EPS)  # rsqrt -> EUP slot
        scale_ref[...] = scale
        shift_ref[...] = beta_ref[...] - mean * scale


# --------------------------------------------------------------------------
# Stage 2: normalize (folded affine) + ReLU + Linear 2 (bf16->f32 MXU).
# Batch tiles are independent -> "parallel" grid axis.
# --------------------------------------------------------------------------
def _stage2_kernel(h_ref, scale_ref, shift_ref, w2_ref, b2_ref, o_ref):
    # BN apply + ReLU in f32 on the VPU.
    h_act = jnp.maximum(h_ref[...] * scale_ref[...] + shift_ref[...], 0.0)
    # Linear 2 on the MXU: bf16 operands, f32 accumulation, f32 bias add.
    o_ref[...] = (
        jnp.dot(h_act.astype(jnp.bfloat16), w2_ref[...],
                preferred_element_type=jnp.float32)
        + b2_ref[...]
    ).astype(o_ref.dtype)


def mlp_forward(x, w1, b1, gamma, beta, w2, b2, *, tb=128):
    """Fused MLP forward. b1 is accepted for API parity but unused (it cancels
    through training-mode BatchNorm, so the output is identical)."""
    del b1
    B, dim = x.shape
    hidden = w1.shape[1]
    proj = w2.shape[1]

    tb = min(tb, B)
    assert B % tb == 0 and tb % 8 == 0, "batch tile must divide B, sublane-aligned"
    nbt = B // tb
    # TODO(synk): pad dim/hidden/proj to multiples of 128 for arbitrary sizes;
    # here feature dims are required lane-dense so every store is unmasked.
    assert dim % 128 == 0 and hidden % 128 == 0 and proj % 128 == 0

    # bf16 MXU operands (halves weight/activation DMA bytes as well).
    x_bf16 = x.astype(jnp.bfloat16)
    w1_bf16 = w1.astype(jnp.bfloat16)
    w2_bf16 = w2.astype(jnp.bfloat16)

    # ---- Stage 1: hidden activation + folded BN scale/shift ----------------
    stage1 = pl.pallas_call(
        functools.partial(_stage1_kernel, batch_size=B),
        out_shape=(
            jax.ShapeDtypeStruct((B, hidden), jnp.float32),   # h
            jax.ShapeDtypeStruct((1, hidden), jnp.float32),   # scale
            jax.ShapeDtypeStruct((1, hidden), jnp.float32),   # shift
        ),
        grid_spec=pltpu.PrefetchScalarGridSpec(
            num_scalar_prefetch=0,
            grid=(nbt,),
            in_specs=[
                pl.BlockSpec((tb, dim), lambda i: (i, 0)),       # x batch tile
                pl.BlockSpec((dim, hidden), lambda i: (0, 0)),   # W1 resident
                pl.BlockSpec((1, hidden), lambda i: (0, 0)),     # gamma
                pl.BlockSpec((1, hidden), lambda i: (0, 0)),     # beta
            ],
            out_specs=(
                pl.BlockSpec((tb, hidden), lambda i: (i, 0)),    # h batch tile
                pl.BlockSpec((1, hidden), lambda i: (0, 0)),     # scale (resident)
                pl.BlockSpec((1, hidden), lambda i: (0, 0)),     # shift (resident)
            ),
            scratch_shapes=[
                pltpu.VMEM((1, hidden), jnp.float32),   # running sum
                pltpu.VMEM((1, hidden), jnp.float32),   # running sum of squares
            ],
        ),
        compiler_params=pltpu.CompilerParams(
            # stats accumulate across batch tiles -> reduction axis.
            dimension_semantics=("arbitrary",),
        ),
        cost_estimate=pl.CostEstimate(
            flops=2 * B * dim * hidden,
            transcendentals=hidden,
            bytes_accessed=(B * dim * 2 + dim * hidden * 2
                            + B * hidden * 4 + 4 * hidden * 4),
        ),
    )
    h, scale, shift = stage1(x_bf16, w1_bf16, gamma, beta)

    # ---- Stage 2: normalize + ReLU + Linear 2 ------------------------------
    stage2 = pl.pallas_call(
        _stage2_kernel,
        out_shape=jax.ShapeDtypeStruct((B, proj), jnp.float32),
        grid_spec=pltpu.PrefetchScalarGridSpec(
            num_scalar_prefetch=0,
            grid=(nbt,),
            in_specs=[
                pl.BlockSpec((tb, hidden), lambda i: (i, 0)),    # h batch tile
                pl.BlockSpec((1, hidden), lambda i: (0, 0)),     # scale
                pl.BlockSpec((1, hidden), lambda i: (0, 0)),     # shift
                pl.BlockSpec((hidden, proj), lambda i: (0, 0)),  # W2 resident
                pl.BlockSpec((1, proj), lambda i: (0, 0)),       # b2
            ],
            out_specs=pl.BlockSpec((tb, proj), lambda i: (i, 0)),
        ),
        compiler_params=pltpu.CompilerParams(
            # batch tiles independent -> megacore-shardable on v7x, no-op elsewhere.
            dimension_semantics=("parallel",),
        ),
        cost_estimate=pl.CostEstimate(
            flops=2 * B * hidden * proj,
            transcendentals=0,
            bytes_accessed=(B * hidden * 4 + hidden * proj * 2
                            + B * proj * 4 + 2 * hidden * 4 + proj * 4),
        ),
    )
    return stage2(h, scale, shift, w2_bf16, b2)


def init_params(key, dim, hidden, proj):
    """Deterministic PyTorch-style init (uniform(-1/sqrt(fan_in), 1/sqrt(fan_in)))."""
    k1, k2, k3, k4 = jax.random.split(key, 4)
    bound1 = 1.0 / jnp.sqrt(dim)
    bound2 = 1.0 / jnp.sqrt(hidden)
    w1 = jax.random.uniform(k1, (dim, hidden), jnp.float32, -bound1, bound1)
    b1 = jax.random.uniform(k2, (1, hidden), jnp.float32, -bound1, bound1)
    gamma = jnp.ones((1, hidden), jnp.float32)   # BatchNorm1d weight init
    beta = jnp.zeros((1, hidden), jnp.float32)   # BatchNorm1d bias init
    w2 = jax.random.uniform(k3, (hidden, proj), jnp.float32, -bound2, bound2)
    b2 = jax.random.uniform(k4, (1, proj), jnp.float32, -bound2, bound2)
    return w1, b1, gamma, beta, w2, b2


def mlp_reference(x, w1, b1, gamma, beta, w2, b2):
    """Plain-JAX f32 reference mirroring PyTorch MLP.forward (training mode).
    Includes b1 to demonstrate that dropping it in the kernel is exact."""
    h = x @ w1 + b1
    mean = jnp.mean(h, axis=0, keepdims=True)
    var = jnp.mean((h - mean) ** 2, axis=0, keepdims=True)
    h = (h - mean) / jnp.sqrt(var + EPS) * gamma + beta
    h = jnp.maximum(h, 0.0)
    return h @ w2 + b2


if __name__ == "__main__":
    # Small but lane-dense / MXU-friendly shapes (all feature dims % 128 == 0).
    B, DIM, HIDDEN, PROJ = 256, 128, 256, 128

    key = jax.random.PRNGKey(0)
    kx, kp = jax.random.split(key)
    x = jax.random.normal(kx, (B, DIM), jnp.float32)
    params = init_params(kp, DIM, HIDDEN, PROJ)

    out = jax.block_until_ready(mlp_forward(x, *params, tb=128))
    ref = mlp_reference(x, *params)

    assert out.shape == (B, PROJ)
    # bf16 MXU operands vs f32 reference -> loose-ish tolerance.
    assert jnp.allclose(out, ref, atol=2e-2, rtol=2e-2), (
        "mismatch vs reference: max abs diff "
        f"{float(jnp.max(jnp.abs(out - ref)))}")

    print("KERNEL_OK")
</pallas_src>

<mosaic_0001>
module attributes {stable_mosaic.version = 11 : i64} {
  func.func @_stage1_kernel(%arg0: i32, %arg1: memref<128x128xbf16, #tpu.memory_space<vmem>>, %arg2: memref<128x256xbf16, #tpu.memory_space<vmem>>, %arg3: memref<1x256xf32, #tpu.memory_space<vmem>>, %arg4: memref<1x256xf32, #tpu.memory_space<vmem>>, %arg5: memref<128x256xf32, #tpu.memory_space<vmem>>, %arg6: memref<1x256xf32, #tpu.memory_space<vmem>>, %arg7: memref<1x256xf32, #tpu.memory_space<vmem>>, %arg8: memref<1x256xf32, #tpu.memory_space<vmem>>, %arg9: memref<1x256xf32, #tpu.memory_space<vmem>>) attributes {dimension_semantics = [#tpu.dimension_semantics<arbitrary>], iteration_bounds = array<i64: 2>, scalar_prefetch = 0 : i64, scratch_operands = 2 : i64, tpu.core_type = #tpu.core_type<tc>, window_params = [{transform_indices = @transform_0, window_bounds = array<i64: 128, 128>}, {pipeline_mode = #tpu.pipeline_mode<synchronous>, transform_indices = @transform_1, window_bounds = array<i64: 128, 256>}, {pipeline_mode = #tpu.pipeline_mode<synchronous>, transform_indices = @transform_2, window_bounds = array<i64: 1, 256>}, {pipeline_mode = #tpu.pipeline_mode<synchronous>, transform_indices = @transform_3, window_bounds = array<i64: 1, 256>}, {transform_indices = @transform_4, window_bounds = array<i64: 128, 256>}, {pipeline_mode = #tpu.pipeline_mode<synchronous>, transform_indices = @transform_5, window_bounds = array<i64: 1, 256>}, {pipeline_mode = #tpu.pipeline_mode<synchronous>, transform_indices = @transform_6, window_bounds = array<i64: 1, 256>}]} {
    %c0_i32 = arith.constant 0 : i32
    %0 = arith.cmpi eq, %arg0, %c0_i32 : i32
    %1 = arith.extui %0 : i1 to i32
    %c0_i32_0 = arith.constant 0 : i32
    %2 = arith.cmpi ne, %1, %c0_i32_0 : i32
    scf.if %2 {
      %cst_17 = arith.constant 0.000000e+00 : f32
      %21 = vector.broadcast %cst_17 : f32 to vector<1x256xf32>
      %c0_18 = arith.constant 0 : index
      %c0_19 = arith.constant 0 : index
      %22 = vector.load %arg8[%c0_18, %c0_19] : memref<1x256xf32, #tpu.memory_space<vmem>>, vector<1x256xf32>
      tpu.vector_store %arg8[%c0_18, %c0_19], %21 {strides = array<i32>} : memref<1x256xf32, #tpu.memory_space<vmem>>, vector<1x256xf32>,
      %cst_20 = arith.constant 0.000000e+00 : f32
      %23 = vector.broadcast %cst_20 : f32 to vector<1x256xf32>
      %c0_21 = arith.constant 0 : index
      %c0_22 = arith.constant 0 : index
      %24 = vector.load %arg9[%c0_21, %c0_22] : memref<1x256xf32, #tpu.memory_space<vmem>>, vector<1x256xf32>
      tpu.vector_store %arg9[%c0_21, %c0_22], %23 {strides = array<i32>} : memref<1x256xf32, #tpu.memory_space<vmem>>, vector<1x256xf32>,
    } else {
    }
    %c0 = arith.constant 0 : index
    %c0_1 = arith.constant 0 : index
    %3 = vector.load %arg1[%c0, %c0_1] : memref<128x128xbf16, #tpu.memory_space<vmem>>, vector<128x128xbf16>
    %c0_2 = arith.constant 0 : index
    %c0_3 = arith.constant 0 : index
    %4 = vector.load %arg2[%c0_2, %c0_3] : memref<128x256xbf16, #tpu.memory_space<vmem>>, vector<128x256xbf16>
    %cst = arith.constant dense<0.000000e+00> : vector<128x256xf32>
    %5 = tpu.matmul %3, %4, %cst {dimension_numbers = #tpu.dot_dimension_numbers<[1], [0], [0], [1], [0, 0, 1, 1], [], []>} : vector<128x128xbf16>, vector<128x256xbf16>, vector<128x256xf32> -> vector<128x256xf32>
    %c0_4 = arith.constant 0 : index
    %c0_5 = arith.constant 0 : index
    %6 = vector.load %arg5[%c0_4, %c0_5] : memref<128x256xf32, #tpu.memory_space<vmem>>, vector<128x256xf32>
    tpu.vector_store %arg5[%c0_4, %c0_5], %5 {strides = array<i32>} : memref<128x256xf32, #tpu.memory_space<vmem>>, vector<128x256xf32>,
    %c0_6 = arith.constant 0 : index
    %c0_7 = arith.constant 0 : index
    %7 = vector.load %arg8[%c0_6, %c0_7] : memref<1x256xf32, #tpu.memory_space<vmem>>, vector<1x256xf32>
    %cst_8 = arith.constant dense<0.000000e+00> : vector<256xf32>
    %8 = vector.multi_reduction <add>, %5, %cst_8 [0] : vector<128x256xf32> to vector<256xf32>
    %9 = vector.shape_cast %8 : vector<256xf32> to vector<1x256xf32>
    %10 = arith.addf %7, %9 : vector<1x256xf32>
    %c0_9 = arith.constant 0 : index
    %c0_10 = arith.constant 0 : index
    %11 = vector.load %arg8[%c0_9, %c0_10] : memref<1x256xf32, #tpu.memory_space<vmem>>, vector<1x256xf32>
    tpu.vector_store %arg8[%c0_9, %c0_10], %10 {strides = array<i32>} : memref<1x256xf32, #tpu.memory_space<vmem>>, vector<1x256xf32>,
    %c0_11 = arith.constant 0 : index
    %c0_12 = arith.constant 0 : index
    %12 = vector.load %arg9[%c0_11, %c0_12] : memref<1x256xf32, #tpu.memory_space<vmem>>, vector<1x256xf32>
    %13 = arith.mulf %5, %5 : vector<128x256xf32>
    %cst_13 = arith.constant dense<0.000000e+00> : vector<256xf32>
    %14 = vector.multi_reduction <add>, %13, %cst_13 [0] : vector<128x256xf32> to vector<256xf32>
    %15 = vector.shape_cast %14 : vector<256xf32> to vector<1x256xf32>
    %16 = arith.addf %12, %15 : vector<1x256xf32>
    %c0_14 = arith.constant 0 : index
    %c0_15 = arith.constant 0 : index
    %17 = vector.load %arg9[%c0_14, %c0_15] : memref<1x256xf32, #tpu.memory_space<vmem>>, vector<1x256xf32>
    tpu.vector_store %arg9[%c0_14, %c0_15], %16 {strides = array<i32>} : memref<1x256xf32, #tpu.memory_space<vmem>>, vector<1x256xf32>,
    %c1_i32 = arith.constant 1 : i32
    %18 = arith.cmpi eq, %arg0, %c1_i32 : i32
    %19 = arith.extui %18 : i1 to i32
    %c0_i32_16 = arith.constant 0 : i32
    %20 = arith.cmpi ne, %19, %c0_i32_16 : i32
    scf.if %20 {
      %c0_17 = arith.constant 0 : index
      %c0_18 = arith.constant 0 : index
      %21 = vector.load %arg8[%c0_17, %c0_18] : memref<1x256xf32, #tpu.memory_space<vmem>>, vector<1x256xf32>
      %cst_19 = arith.constant 3.906250e-03 : f32
      %22 = vector.broadcast %cst_19 : f32 to vector<1x256xf32>
      %23 = arith.mulf %21, %22 : vector<1x256xf32>
      %c0_20 = arith.constant 0 : index
      %c0_21 = arith.constant 0 : index
      %24 = vector.load %arg9[%c0_20, %c0_21] : memref<1x256xf32, #tpu.memory_space<vmem>>, vector<1x256xf32>
      %cst_22 = arith.constant 3.906250e-03 : f32
      %25 = vector.broadcast %cst_22 : f32 to vector<1x256xf32>
      %26 = arith.mulf %24, %25 : vector<1x256xf32>
      %27 = arith.mulf %23, %23 : vector<1x256xf32>
      %28 = arith.subf %26, %27 : vector<1x256xf32>
      %c0_23 = arith.constant 0 : index
      %c0_24 = arith.constant 0 : index
      %29 = vector.load %arg3[%c0_23, %c0_24] : memref<1x256xf32, #tpu.memory_space<vmem>>, vector<1x256xf32>
      %cst_25 = arith.constant 9.99999974E-6 : f32
      %30 = vector.broadcast %cst_25 : f32 to vector<1x256xf32>
      %31 = arith.addf %28, %30 : vector<1x256xf32>
      %32 = math.rsqrt %31 : vector<1x256xf32>
      %33 = arith.mulf %29, %32 : vector<1x256xf32>
      %c0_26 = arith.constant 0 : index
      %c0_27 = arith.constant 0 : index
      %34 = vector.load %arg6[%c0_26, %c0_27] : memref<1x256xf32, #tpu.memory_space<vmem>>, vector<1x256xf32>
      tpu.vector_store %arg6[%c0_26, %c0_27], %33 {strides = array<i32>} : memref<1x256xf32, #tpu.memory_space<vmem>>, vector<1x256xf32>,
      %c0_28 = arith.constant 0 : index
      %c0_29 = arith.constant 0 : index
      %35 = vector.load %arg4[%c0_28, %c0_29] : memref<1x256xf32, #tpu.memory_space<vmem>>, vector<1x256xf32>
      %36 = arith.mulf %23, %33 : vector<1x256xf32>
      %37 = arith.subf %35, %36 : vector<1x256xf32>
      %c0_30 = arith.constant 0 : index
      %c0_31 = arith.constant 0 : index
      %38 = vector.load %arg7[%c0_30, %c0_31] : memref<1x256xf32, #tpu.memory_space<vmem>>, vector<1x256xf32>
      tpu.vector_store %arg7[%c0_30, %c0_31], %37 {strides = array<i32>} : memref<1x256xf32, #tpu.memory_space<vmem>>, vector<1x256xf32>,
    } else {
    }
    return
  }
  func.func @transform_0(%arg0: i32) -> (i32, i32) {
    %c0_i32 = arith.constant 0 : i32
    %c0_i32_0 = arith.constant 0 : i32
    return %arg0, %c0_i32 : i32, i32
  }
  func.func @transform_1(%arg0: i32) -> (i32, i32) {
    %c0_i32 = arith.constant 0 : i32
    %c0_i32_0 = arith.constant 0 : i32
    %c0_i32_1 = arith.constant 0 : i32
    return %c0_i32, %c0_i32_0 : i32, i32
  }
  func.func @transform_2(%arg0: i32) -> (i32, i32) {
    %c0_i32 = arith.constant 0 : i32
    %c0_i32_0 = arith.constant 0 : i32
    %c0_i32_1 = arith.constant 0 : i32
    return %c0_i32, %c0_i32_0 : i32, i32
  }
  func.func @transform_3(%arg0: i32) -> (i32, i32) {
    %c0_i32 = arith.constant 0 : i32
    %c0_i32_0 = arith.constant 0 : i32
    %c0_i32_1 = arith.constant 0 : i32
    return %c0_i32, %c0_i32_0 : i32, i32
  }
  func.func @transform_4(%arg0: i32) -> (i32, i32) {
    %c0_i32 = arith.constant 0 : i32
    %c0_i32_0 = arith.constant 0 : i32
    return %arg0, %c0_i32 : i32, i32
  }
  func.func @transform_5(%arg0: i32) -> (i32, i32) {
    %c0_i32 = arith.constant 0 : i32
    %c0_i32_0 = arith.constant 0 : i32
    %c0_i32_1 = arith.constant 0 : i32
    return %c0_i32, %c0_i32_0 : i32, i32
  }
  func.func @transform_6(%arg0: i32) -> (i32, i32) {
    %c0_i32 = arith.constant 0 : i32
    %c0_i32_0 = arith.constant 0 : i32
    %c0_i32_1 = arith.constant 0 : i32
    return %c0_i32, %c0_i32_0 : i32, i32
  }
}

</mosaic_0001>

<llo_original>
// kernel: tpu_custom_call.1
$region0: #{tpu_custom_call.1}
  #allocation0 [shape = 'u32[]', space=smem, size = 0x4, offset = 0x4, fixed_abs, tag = 'smem constant byte address 0x4 - core index']
  #allocation1 [shape = 'u32[144,128]{1,0:T(1,128)}', space=vmem, size = 0x12000, scoped, tag = 'internal scratch']
  #allocation2 [shape = 'f32[1,256]{1,0:T(1,128)}', space=vmem, size = 0x400, scoped, tag = 'scratch operand']
  #allocation3 [shape = 'f32[1,256]{1,0:T(1,128)}', space=vmem, size = 0x400, scoped, tag = 'scratch operand']
  %s0 = inlined_call_operand.hbm [shape: bf16[256,128], index: 0, kind: input, shape index: {}]
  %s1 = inlined_call_operand.hbm [shape: bf16[128,256], index: 1, kind: input, shape index: {}]
  %s2 = inlined_call_operand.vmem [shape: f32[1,256], index: 2, kind: input, shape index: {}]
  %s3 = inlined_call_operand.vmem [shape: f32[1,256], index: 3, kind: input, shape index: {}]
  %s4 = inlined_call_operand.hbm [shape: f32[256,256], index: 4, kind: output, shape index: {0}]
  %s5 = inlined_call_operand.hbm [shape: f32[1,256], index: 5, kind: output, shape index: {1}]
  %s6 = inlined_call_operand.hbm [shape: f32[1,256], index: 6, kind: output, shape index: {2}]
  %7 = xla_tuple %s4, %s5, %s6
  %s8 = sld [smem:[#allocation0]]
  $region81: #{tpu_custom_call.1} parent=0
    _
  %s10 = ssub.s32 1, %s8
  %s11 = scalar_select 0, %s10, %s8
  $region1: #{tpu_custom_call.1} parent=0
    #allocation4 [shape = 'u8[65536]{0}', space=vmem, size = 0x10000, scoped, tag = 'input window, operand 0']
    #allocation5 [shape = 's32[2]{0}', space=sflag, size = 0x8, scoped, tag = 'scoped memory for tpu_custom_call.1']
    #allocation6 [shape = 's32[2]{0}', space=sflag, size = 0x8, scoped, tag = 'scoped memory for tpu_custom_call.1']
    #allocation7 [shape = 'u8[65536]{0}', space=vmem, size = 0x10000, scoped, tag = 'input window, operand 1, single buffered']
    #allocation8 [shape = 's32[1]{0}', space=sflag, size = 0x4, scoped, tag = 'scoped memory for tpu_custom_call.1']
    #allocation9 [shape = 'u8[262144]{0}', space=vmem, size = 0x40000, scoped, tag = 'output window, operand 0']
    #allocation10 [shape = 'u8[1024]{0}', space=vmem, size = 0x400, scoped, tag = 'output window, operand 1, single buffered']
    #allocation11 [shape = 's32[1]{0}', space=sflag, size = 0x4, scoped, tag = 'scoped memory for tpu_custom_call.1']
    #allocation12 [shape = 'u8[1024]{0}', space=vmem, size = 0x400, scoped, tag = 'output window, operand 2, single buffered']
    %12 = vsyncpa [#allocation5], 0
    %s13 = scalar_lea.sflag [#allocation5], 1
    %14 = vsyncpa %s13, 0
    %15 = vsyncpa [#allocation8], 0
    %16 = vsyncpa [#allocation6], 0
    %s17 = scalar_lea.sflag [#allocation6], 1
    %18 = vsyncpa %s17, 0
    %19 = vsyncpa [#allocation11], 0
    loop: start=0, step=1, limit=4
    $region2: #{tpu_custom_call.1} parent=1 // loop_pre_header
      _
    $region3: #{tpu_custom_call.1} parent=1 // loop_header
      %s21 = sphi 0, %s25
      %p22 = scmp.ge.s32.totalorder %s21, 4
      %s31 = sphi 0, %s33
      %s34 = sphi 0, %s31
      %s35 = sphi 0, %s34
      %s51 = sphi 0, %s35
      %s55 = sphi 0, %s55
      %s57 = sphi 0, %s55
      %s58 = sphi 0, %s57
      %s72 = sphi 0, %s58
      %s76 = sphi 0, %s76
      %s78 = sphi 0, %s76
      %s79 = sphi 0, %s78
      %s93 = sphi 0, %s79
      %s97 = sphi 0, %s97
      %s99 = sphi 0, %s97
      %s100 = sphi 0, %s99
      %s114 = sphi 0, %s100
      %s120 = sphi 0, %s122
      %s123 = sphi 0, %s120
      %s124 = sphi 0, %s123
      %s140 = sphi 0, %s124
      %s144 = sphi 0, %s144
      %s146 = sphi 0, %s144
      %s147 = sphi 0, %s146
      %s161 = sphi 0, %s147
      %s165 = sphi 0, %s165
      %s167 = sphi 0, %s165
      %s168 = sphi 0, %s167
      %s182 = sphi 0, %s168
    $region4: #{tpu_custom_call.1} parent=1 // loop_header_branch
      %24 = sbr.rel (%p22) target = $region8
    $region5: #{tpu_custom_call.1} parent=1 // loop_body
      %s26 = ssub.s32 %s21, 1
      %s27 = ssub.s32 %s21, 2
      %s28 = sadd.s32 %s21, 1
      %s29 = ssub.s32 %s21, %s28
      %p30 = scmp.eq.s32.totalorder %s29, 0
      %s32 = sadd.s32 %s31, 1
      %s33 = scalar_select %p30, %s31, %s32
      %p36 = pneg %p30
      %p37 = scmp.eq.s32.totalorder %s21, 1
      %p38 = por %p36, %p37
      %p39 = scmp.ne.s32.totalorder %s31, %s34
      %p40 = scmp.eq.s32.totalorder %s21, 0
      %p41 = por %p39, %p40
      %p42 = scmp.ne.s32.totalorder %s31, %s34
      %p43 = scmp.eq.s32.totalorder %s26, 1
      %p44 = por %p42, %p43
      %p45 = scmp.ne.s32.totalorder %s34, %s35
      %p46 = scmp.eq.s32.totalorder %s26, 0
      %p47 = por %p45, %p46
      %p48 = scmp.ne.s32.totalorder %s34, %s35
      %p49 = scmp.eq.s32.totalorder %s27, 1
      %p50 = por %p48, %p49
      %p52 = scmp.ne.s32.totalorder %s35, %s51
      %p53 = scmp.eq.s32.totalorder %s27, 0
      %p54 = por %p52, %p53
      %s56 = sadd.s32 %s55, 1
      %p59 = scmp.eq.s32.totalorder %s21, 1
      %p60 = scmp.ne.s32.totalorder %s55, %s57
      %p61 = scmp.eq.s32.totalorder %s21, 0
      %p62 = por %p60, %p61
      %p63 = scmp.ne.s32.totalorder %s55, %s57
      %p64 = scmp.eq.s32.totalorder %s26, 1
      %p65 = por %p63, %p64
      %p66 = scmp.ne.s32.totalorder %s57, %s58
      %p67 = scmp.eq.s32.totalorder %s26, 0
      %p68 = por %p66, %p67
      %p69 = scmp.ne.s32.totalorder %s57, %s58
      %p70 = scmp.eq.s32.totalorder %s27, 1
      %p71 = por %p69, %p70
      %p73 = scmp.ne.s32.totalorder %s58, %s72
      %p74 = scmp.eq.s32.totalorder %s27, 0
      %p75 = por %p73, %p74
      %s77 = sadd.s32 %s76, 1
      %p80 = scmp.eq.s32.totalorder %s21, 1
      %p81 = scmp.ne.s32.totalorder %s76, %s78
      %p82 = scmp.eq.s32.totalorder %s21, 0
      %p83 = por %p81, %p82
      %p84 = scmp.ne.s32.totalorder %s76, %s78
      %p85 = scmp.eq.s32.totalorder %s26, 1
      %p86 = por %p84, %p85
      %p87 = scmp.ne.s32.totalorder %s78, %s79
      %p88 = scmp.eq.s32.totalorder %s26, 0
      %p89 = por %p87, %p88
      %p90 = scmp.ne.s32.totalorder %s78, %s79
      %p91 = scmp.eq.s32.totalorder %s27, 1
      %p92 = por %p90, %p91
      %p94 = scmp.ne.s32.totalorder %s79, %s93
      %p95 = scmp.eq.s32.totalorder %s27, 0
      %p96 = por %p94, %p95
      %s98 = sadd.s32 %s97, 1
      %p101 = scmp.eq.s32.totalorder %s21, 1
      %p102 = scmp.ne.s32.totalorder %s97, %s99
      %p103 = scmp.eq.s32.totalorder %s21, 0
      %p104 = por %p102, %p103
      %p105 = scmp.ne.s32.totalorder %s97, %s99
      %p106 = scmp.eq.s32.totalorder %s26, 1
      %p107 = por %p105, %p106
      %p108 = scmp.ne.s32.totalorder %s99, %s100
      %p109 = scmp.eq.s32.totalorder %s26, 0
      %p110 = por %p108, %p109
      %p111 = scmp.ne.s32.totalorder %s99, %s100
      %p112 = scmp.eq.s32.totalorder %s27, 1
      %p113 = por %p111, %p112
      %p115 = scmp.ne.s32.totalorder %s100, %s114
      %p116 = scmp.eq.s32.totalorder %s27, 0
      %p117 = por %p115, %p116
      %s118 = ssub.s32 %s21, %s28
      %p119 = scmp.eq.s32.totalorder %s118, 0
      %s121 = sadd.s32 %s120, 1
      %s122 = scalar_select %p119, %s120, %s121
      %p125 = pneg %p119
      %p126 = scmp.eq.s32.totalorder %s21, 1
      %p127 = por %p125, %p126
      %p128 = scmp.ne.s32.totalorder %s120, %s123
      %p129 = scmp.eq.s32.totalorder %s21, 0
      %p130 = por %p128, %p129
      %p131 = scmp.ne.s32.totalorder %s120, %s123
      %p132 = scmp.eq.s32.totalorder %s26, 1
      %p133 = por %p131, %p132
      %p134 = scmp.ne.s32.totalorder %s123, %s124
      %p135 = scmp.eq.s32.totalorder %s26, 0
      %p136 = por %p134, %p135
      %p137 = scmp.ne.s32.totalorder %s123, %s124
      %p138 = scmp.eq.s32.totalorder %s27, 1
      %p139 = por %p137, %p138
      %p141 = scmp.ne.s32.totalorder %s124, %s140
      %p142 = scmp.eq.s32.totalorder %s27, 0
      %p143 = por %p141, %p142
      %s145 = sadd.s32 %s144, 1
      %p148 = scmp.eq.s32.totalorder %s21, 1
      %p149 = scmp.ne.s32.totalorder %s144, %s146
      %p150 = scmp.eq.s32.totalorder %s21, 0
      %p151 = por %p149, %p150
      %p152 = scmp.ne.s32.totalorder %s144, %s146
      %p153 = scmp.eq.s32.totalorder %s26, 1
      %p154 = por %p152, %p153
      %p155 = scmp.ne.s32.totalorder %s146, %s147
      %p156 = scmp.eq.s32.totalorder %s26, 0
      %p157 = por %p155, %p156
      %p158 = scmp.ne.s32.totalorder %s146, %s147
      %p159 = scmp.eq.s32.totalorder %s27, 1
      %p160 = por %p158, %p159
      %p162 = scmp.ne.s32.totalorder %s147, %s161
      %p163 = scmp.eq.s32.totalorder %s27, 0
      %p164 = por %p162, %p163
      %s166 = sadd.s32 %s165, 1
      %p169 = scmp.eq.s32.totalorder %s21, 1
      %p170 = scmp.ne.s32.totalorder %s165, %s167
      %p171 = scmp.eq.s32.totalorder %s21, 0
      %p172 = por %p170, %p171
      %p173 = scmp.ne.s32.totalorder %s165, %s167
      %p174 = scmp.eq.s32.totalorder %s26, 1
      %p175 = por %p173, %p174
      %p176 = scmp.ne.s32.totalorder %s167, %s168
      %p177 = scmp.eq.s32.totalorder %s26, 0
      %p178 = por %p176, %p177
      %p179 = scmp.ne.s32.totalorder %s167, %s168
      %p180 = scmp.eq.s32.totalorder %s27, 1
      %p181 = por %p179, %p180
      %p183 = scmp.ne.s32.totalorder %s168, %s182
      %p184 = scmp.eq.s32.totalorder %s27, 0
      %p185 = por %p183, %p184
      %p186 = scmp.le.s32.totalorder 1, %s21
      %p187 = scmp.lt.s32.totalorder %s21, 3
      %p188 = pnand %p186, %p187
      %p189 = pneg %p188
      // Predicated region
      $region9: #{tpu_custom_call.1} parent=5 // pred_check
        _
      $region10: #{tpu_custom_call.1} parent=5 // pred_check_branch
        %191 = sbr.rel (%p188) target = $region12
      $region11: #{tpu_custom_call.1} parent=5 // pred_region
        %s192 = ssub.s32 %s21, 1
        // Predicated region
        $region13: #{tpu_custom_call.1} parent=11 // pred_check
          %p193 = pneg %p68
        $region14: #{tpu_custom_call.1} parent=11 // pred_check_branch
          %195 = sbr.rel (%p193) target = $region16
        $region15: #{tpu_custom_call.1} parent=11 // pred_region
          %s197 = ssub.s32 2048, 2048
          %198 = vsyncadd [#allocation8], %s197
          %s199 = sshll.u32 [#allocation7], 4
          %s200 = int_to_ptr.vmem [resolvable:$true] %s199
          %205 = dma.hbm_to_vmem [thread:$0]  %s1, 2048, %s200, [#allocation8], 128, 128, 8
        $region16: #{tpu_custom_call.1} parent=11 // pred_fallthru
          _
        // Predicated region
        $region17: #{tpu_custom_call.1} parent=11 // pred_check
          %p206 = pneg %p89
        $region18: #{tpu_custom_call.1} parent=11 // pred_check_branch
          %208 = sbr.rel (%p206) target = $region20
        $region19: #{tpu_custom_call.1} parent=11 // pred_region
          _
        $region20: #{tpu_custom_call.1} parent=11 // pred_fallthru
          _
        // Predicated region
        $region21: #{tpu_custom_call.1} parent=11 // pred_check
          %p209 = pneg %p110
        $region22: #{tpu_custom_call.1} parent=11 // pred_check_branch
          %211 = sbr.rel (%p209) target = $region24
        $region23: #{tpu_custom_call.1} parent=11 // pred_region
          _
        $region24: #{tpu_custom_call.1} parent=11 // pred_fallthru
          _
      $region12: #{tpu_custom_call.1} parent=5 // pred_fallthru
        _
      %p212 = scmp.lt.s32.totalorder %s21, 2
      // Predicated region
      $region25: #{tpu_custom_call.1} parent=5 // pred_check
        %p213 = pneg %p212
      $region26: #{tpu_custom_call.1} parent=5 // pred_check_branch
        %215 = sbr.rel (%p213) target = $region28
      $region27: #{tpu_custom_call.1} parent=5 // pred_region
        // Predicated region
        $region29: #{tpu_custom_call.1} parent=27 // pred_check
          %p216 = pneg %p41
        $region30: #{tpu_custom_call.1} parent=27 // pred_check_branch
          %218 = sbr.rel (%p216) target = $region32
        $region31: #{tpu_custom_call.1} parent=27 // pred_region
          %s219 = sand.u32 %s31, 1
          %s220 = scalar_lea.sflag [#allocation5], %s219
          %s221 = sand.u32 %s31, 1
          %s222 = smul.addr %s221, 64
          %s223 = scalar_lea.vmem [#allocation4], %s222
          %s224 = smul.u32 16, %s21
          %s226 = ssub.s32 1024, 1024
          %227 = vsyncadd %s220, %s226
          %s228 = smul.addr %s224, 64
          %s229 = scalar_lea.hbm %s0, %s228
          %s230 = sshll.u32 %s223, 4
          %s231 = int_to_ptr.vmem [resolvable:$true] %s230
          %236 = dma.hbm_to_vmem [thread:$0]  %s229, 1024, %s231, %s220, 64, 64, 4
        $region32: #{tpu_custom_call.1} parent=27 // pred_fallthru
          _
      $region28: #{tpu_custom_call.1} parent=5 // pred_fallthru
        _
      %p237 = scmp.le.s32.totalorder 1, %s21
      %p238 = scmp.lt.s32.totalorder %s21, 3
      %p239 = pnand %p237, %p238
      %p240 = pneg %p239
      // Predicated region
      $region33: #{tpu_custom_call.1} parent=5 // pred_check
        _
      $region34: #{tpu_custom_call.1} parent=5 // pred_check_branch
        %242 = sbr.rel (%p239) target = $region36
      $region35: #{tpu_custom_call.1} parent=5 // pred_region
        %s243 = ssub.s32 %s21, 1
        %s244 = sand.u32 %s34, 1
        %s245 = scalar_lea.sflag [#allocation5], %s244
        %s246 = sand.u32 %s34, 1
        %s247 = smul.addr %s246, 64
        %s248 = scalar_lea.vmem [#allocation4], %s247
        // Predicated region
        $region37: #{tpu_custom_call.1} parent=35 // pred_check
          %p249 = pneg %p47
        $region38: #{tpu_custom_call.1} parent=35 // pred_check_branch
          %251 = sbr.rel (%p249) target = $region40
        $region39: #{tpu_custom_call.1} parent=35 // pred_region
          %252 = dma.done %s245, 1024
        $region40: #{tpu_custom_call.1} parent=35 // pred_fallthru
          _
        // Predicated region
        $region41: #{tpu_custom_call.1} parent=35 // pred_check
          %p253 = pneg %p68
        $region42: #{tpu_custom_call.1} parent=35 // pred_check_branch
          %255 = sbr.rel (%p253) target = $region44
        $region43: #{tpu_custom_call.1} parent=35 // pred_region
          %256 = dma.done [#allocation8], 2048
        $region44: #{tpu_custom_call.1} parent=35 // pred_fallthru
          _
        %s257 = sand.u32 %s34, 1
        %s258 = scalar_lea.sflag [#allocation5], %s257
        %s259 = sand.u32 %s34, 1
        %s260 = smul.addr %s259, 64
        %s261 = scalar_lea.vmem [#allocation4], %s260
        %p262 = pneg %p47
        %p263 = pneg %p44
        %p264 = pneg %p68
        %p265 = pneg %p65
        %p266 = pneg %p89
        %p267 = pneg %p86
        %p268 = pneg %p110
        %p269 = pneg %p107
        %p270 = pneg %p136
        %p271 = pneg %p133
        %s272 = sand.u32 %s123, 1
        %s273 = scalar_lea.sflag [#allocation6], %s272
        %s274 = sand.u32 %s123, 1
        %s275 = smul.addr %s274, 256
        %s276 = scalar_lea.vmem [#allocation9], %s275
        %p277 = pneg %p157
        %p278 = pneg %p154
        %p279 = pneg %p178
        %p280 = pneg %p175
        %s281 = smul.u32 16, %s26
        %s282 = smul.u32 16, %s26
        %p284 = scmp.eq.s32.totalorder %s26, 0
        // Predicated region
        $region45: #{tpu_custom_call.1} parent=35 // pred_check
          %p285 = pneg %p284
        $region46: #{tpu_custom_call.1} parent=35 // pred_check_branch
          %287 = sbr.rel (%p285) target = $region48
        $region47: #{tpu_custom_call.1} parent=35 // pred_region
          %v288 = vlaneseq
          %vm289 = vcmp.ge.s32.totalorder %v288, 0
          %vm290 = vcmp.lt.s32.totalorder %v288, 256
          %vm291 = vmand %vm289, %vm290
          %292 = vst.msk [vmem:[#allocation2] sm:$0x3] %vm291, 0.0
          %293 = vst.msk [vmem:[#allocation3] sm:$0x3] %vm291, 0.0
        $region48: #{tpu_custom_call.1} parent=35 // pred_fallthru
          _
        %v294 = vld [vmem:[%s248] sm:$0xf]
        %v295 = vld [vmem:[%s248 + $0x4] sm:$0xf]
        %v296 = vld [vmem:[%s248 + $0x8] sm:$0xf]
        %v297 = vld [vmem:[%s248 + $0xc] sm:$0xf]
        %v298 = vld [vmem:[%s248 + $0x10] sm:$0xf]
        %v299 = vld [vmem:[%s248 + $0x14] sm:$0xf]
        %v300 = vld [vmem:[%s248 + $0x18] sm:$0xf]
        %v301 = vld [vmem:[%s248 + $0x1c] sm:$0xf]
        %v302 = vld [vmem:[%s248 + $0x20] sm:$0xf]
        %v303 = vld [vmem:[%s248 + $0x24] sm:$0xf]
        %v304 = vld [vmem:[%s248 + $0x28] sm:$0xf]
        %v305 = vld [vmem:[%s248 + $0x2c] sm:$0xf]
        %v306 = vld [vmem:[%s248 + $0x30] sm:$0xf]
        %v307 = vld [vmem:[%s248 + $0x34] sm:$0xf]
        %v308 = vld [vmem:[%s248 + $0x38] sm:$0xf]
        %v309 = vld [vmem:[%s248 + $0x3c] sm:$0xf]
        %v310 = vld [vmem:[#allocation7] sm:$0xff]
        %v311 = vld [vmem:[#allocation7 + $0x8] sm:$0xff]
        %v312 = vld [vmem:[#allocation7 + $0x10] sm:$0xff]
        %v313 = vld [vmem:[#allocation7 + $0x18] sm:$0xff]
        %v314 = vld [vmem:[#allocation7 + $0x20] sm:$0xff]
        %v315 = vld [vmem:[#allocation7 + $0x28] sm:$0xff]
        %v316 = vld [vmem:[#allocation7 + $0x30] sm:$0xff]
        %v317 = vld [vmem:[#allocation7 + $0x38] sm:$0xff]
        %v318 = vld [vmem:[#allocation7 + $0x40] sm:$0xff]
        %v319 = vld [vmem:[#allocation7 + $0x48] sm:$0xff]
        %v320 = vld [vmem:[#allocation7 + $0x50] sm:$0xff]
        %v321 = vld [vmem:[#allocation7 + $0x58] sm:$0xff]
        %v322 = vld [vmem:[#allocation7 + $0x60] sm:$0xff]
        %v323 = vld [vmem:[#allocation7 + $0x68] sm:$0xff]
        %v324 = vld [vmem:[#allocation7 + $0x70] sm:$0xff]
        %v325 = vld [vmem:[#allocation7 + $0x78] sm:$0xff]
        %v342 = vunpack.c.l.b16 %v294
        %v343 = vunpack.c.l.b16 %v295
        %v344 = vunpack.c.l.b16 %v296
        %v345 = vunpack.c.l.b16 %v297
        %v346 = vunpack.c.l.b16 %v298
        %v347 = vunpack.c.l.b16 %v299
        %v348 = vunpack.c.l.b16 %v300
        %v349 = vunpack.c.l.b16 %v301
        %v350 = vunpack.c.l.b16 %v302
        %v351 = vunpack.c.l.b16 %v303
        %v352 = vunpack.c.l.b16 %v304
        %v353 = vunpack.c.l.b16 %v305
        %v354 = vunpack.c.l.b16 %v306
        %v355 = vunpack.c.l.b16 %v307
        %v356 = vunpack.c.l.b16 %v308
        %v357 = vunpack.c.l.b16 %v309
        %v358 = vpack.c.b16 %v343, %v342
        %v359 = vpack.c.b16 %v345, %v344
        %v360 = vpack.c.b16 %v347, %v346
        %v361 = vpack.c.b16 %v349, %v348
        %v362 = vpack.c.b16 %v351, %v350
        %v363 = vpack.c.b16 %v353, %v352
        %v364 = vpack.c.b16 %v355, %v354
        %v365 = vpack.c.b16 %v357, %v356
        %v390 = vunpack.c.l.b16 %v310
        %v391 = vunpack.c.h.b16 %v310
        %v392 = vunpack.c.l.b16 %v311
        %v393 = vunpack.c.h.b16 %v311
        %v394 = vunpack.c.l.b16 %v312
        %v395 = vunpack.c.h.b16 %v312
        %v396 = vunpack.c.l.b16 %v313
        %v397 = vunpack.c.h.b16 %v313
        %v398 = vunpack.c.l.b16 %v314
        %v399 = vunpack.c.h.b16 %v314
        %v400 = vunpack.c.l.b16 %v315
        %v401 = vunpack.c.h.b16 %v315
        %v402 = vunpack.c.l.b16 %v316
        %v403 = vunpack.c.h.b16 %v316
        %v404 = vunpack.c.l.b16 %v317
        %v405 = vunpack.c.h.b16 %v317
        %v406 = vunpack.c.l.b16 %v318
        %v407 = vunpack.c.h.b16 %v318
        %v408 = vunpack.c.l.b16 %v319
        %v409 = vunpack.c.h.b16 %v319
        %v410 = vunpack.c.l.b16 %v320
        %v411 = vunpack.c.h.b16 %v320
        %v412 = vunpack.c.l.b16 %v321
        %v413 = vunpack.c.h.b16 %v321
        %v414 = vunpack.c.l.b16 %v322
        %v415 = vunpack.c.h.b16 %v322
        %v416 = vunpack.c.l.b16 %v323
        %v417 = vunpack.c.h.b16 %v323
        %v418 = vunpack.c.l.b16 %v324
        %v419 = vunpack.c.h.b16 %v324
        %v420 = vunpack.c.l.b16 %v325
        %v421 = vunpack.c.h.b16 %v325
        %v422 = vpack.c.b16 %v392, %v390
        %v423 = vpack.c.b16 %v393, %v391
        %v424 = vpack.c.b16 %v396, %v394
        %v425 = vpack.c.b16 %v397, %v395
        %v426 = vpack.c.b16 %v400, %v398
        %v427 = vpack.c.b16 %v401, %v399
        %v428 = vpack.c.b16 %v404, %v402
        %v429 = vpack.c.b16 %v405, %v403
        %v430 = vpack.c.b16 %v408, %v406
        %v431 = vpack.c.b16 %v409, %v407
        %v432 = vpack.c.b16 %v412, %v410
        %v433 = vpack.c.b16 %v413, %v411
        %v434 = vpack.c.b16 %v416, %v414
        %v435 = vpack.c.b16 %v417, %v415
        %v436 = vpack.c.b16 %v420, %v418
        %v437 = vpack.c.b16 %v421, %v419
        %454 = vmatprep.subr.bf16.mxu0 %v437
        %455 = vmatpush1.bf16.msra.mxu0 %v436
        %456 = vmatprep.subr.bf16.mxu0 %v435
        %457 = vmatpush1.bf16.msra.mxu0 %v434
        %458 = vmatprep.subr.bf16.mxu0 %v433
        %459 = vmatpush1.bf16.msra.mxu0 %v432
        %460 = vmatprep.subr.bf16.mxu0 %v431
        %461 = vmatpush1.bf16.msra.mxu0 %v430
        %462 = vmatprep.subr.bf16.mxu0 %v429
        %463 = vmatpush1.bf16.msra.mxu0 %v428
        %464 = vmatprep.subr.bf16.mxu0 %v427
        %465 = vmatpush1.bf16.msra.mxu0 %v426
        %466 = vmatprep.subr.bf16.mxu0 %v425
        %467 = vmatpush1.bf16.msra.mxu0 %v424
        %468 = vmatprep.subr.bf16.mxu0 %v423
        %469 = vmatpush1.bf16.msra.mxu0 %v422
        %470 = vmatprep.subr.bf16.mxu0 0
        %471 = vmatpush2.bf16.msra.mxu0 0
        %472 = vmatprep.subr.bf16.mxu0 0
        %473 = vmatpush2.bf16.msra.mxu0 0
        %474 = vmatprep.subr.bf16.mxu0 0
        %475 = vmatpush2.bf16.msra.mxu0 0
        %476 = vmatprep.subr.bf16.mxu0 0
        %477 = vmatpush2.bf16.msra.mxu0 0
        %478 = vmatprep.subr.bf16.mxu0 0
        %479 = vmatpush2.bf16.msra.mxu0 0
        %480 = vmatprep.subr.bf16.mxu0 0
        %481 = vmatpush2.bf16.msra.mxu0 0
        %482 = vmatprep.subr.bf16.mxu0 0
        %483 = vmatpush2.bf16.msra.mxu0 0
        %484 = vmatprep.subr.bf16.mxu0 0
        %485 = vmatpush2.bf16.msra.mxu0 0
        %486 = vmatprep.mubr.bf16.mxu0 0
        %487 = vmatmul.mubr.bf16.gmra.mxu0 %v358
        %v488 = vpop.f32.mrf.mxu0
        %v489 = vadd.f32 0.0, %v488
        %v490 = vpop.f32.mrf.mxu0
        %v491 = vadd.f32 0.0, %v490
        %v492 = vpop.f32.mrf.mxu0
        %v493 = vadd.f32 0.0, %v492
        %v494 = vpop.f32.mrf.mxu0
        %v495 = vadd.f32 0.0, %v494
        %496 = vmatprep.mubr.bf16.mxu0 0
        %497 = vmatmul.mubr.bf16.gmra.mxu0 %v359
        %v498 = vpop.f32.mrf.mxu0
        %v499 = vadd.f32 0.0, %v498
        %v500 = vpop.f32.mrf.mxu0
        %v501 = vadd.f32 0.0, %v500
        %v502 = vpop.f32.mrf.mxu0
        %v503 = vadd.f32 0.0, %v502
        %v504 = vpop.f32.mrf.mxu0
        %v505 = vadd.f32 0.0, %v504
        %506 = vmatprep.mubr.bf16.mxu0 0
        %507 = vmatmul.mubr.bf16.gmra.mxu0 %v360
        %v508 = vpop.f32.mrf.mxu0
        %v509 = vadd.f32 0.0, %v508
        %v510 = vpop.f32.mrf.mxu0
        %v511 = vadd.f32 0.0, %v510
        %v512 = vpop.f32.mrf.mxu0
        %v513 = vadd.f32 0.0, %v512
        %v514 = vpop.f32.mrf.mxu0
        %v515 = vadd.f32 0.0, %v514
        %516 = vmatprep.mubr.bf16.mxu0 0
        %517 = vmatmul.mubr.bf16.gmra.mxu0 %v361
        %v518 = vpop.f32.mrf.mxu0
        %v519 = vadd.f32 0.0, %v518
        %v520 = vpop.f32.mrf.mxu0
        %v521 = vadd.f32 0.0, %v520
        %v522 = vpop.f32.mrf.mxu0
        %v523 = vadd.f32 0.0, %v522
        %v524 = vpop.f32.mrf.mxu0
        %v525 = vadd.f32 0.0, %v524
        %526 = vmatprep.mubr.bf16.mxu0 0
        %527 = vmatmul.mubr.bf16.gmra.mxu0 %v362
        %v528 = vpop.f32.mrf.mxu0
        %v529 = vadd.f32 0.0, %v528
        %v530 = vpop.f32.mrf.mxu0
        %v531 = vadd.f32 0.0, %v530
        %v532 = vpop.f32.mrf.mxu0
        %v533 = vadd.f32 0.0, %v532
        %v534 = vpop.f32.mrf.mxu0
        %v535 = vadd.f32 0.0, %v534
        %536 = vmatprep.mubr.bf16.mxu0 0
        %537 = vmatmul.mubr.bf16.gmra.mxu0 %v363
        %v538 = vpop.f32.mrf.mxu0
        %v539 = vadd.f32 0.0, %v538
        %v540 = vpop.f32.mrf.mxu0
        %v541 = vadd.f32 0.0, %v540
        %v542 = vpop.f32.mrf.mxu0
        %v543 = vadd.f32 0.0, %v542
        %v544 = vpop.f32.mrf.mxu0
        %v545 = vadd.f32 0.0, %v544
        %546 = vmatprep.mubr.bf16.mxu0 0
        %547 = vmatmul.mubr.bf16.gmra.mxu0 %v364
        %v548 = vpop.f32.mrf.mxu0
        %v549 = vadd.f32 0.0, %v548
        %v550 = vpop.f32.mrf.mxu0
        %v551 = vadd.f32 0.0, %v550
        %v552 = vpop.f32.mrf.mxu0
        %v553 = vadd.f32 0.0, %v552
        %v554 = vpop.f32.mrf.mxu0
        %v555 = vadd.f32 0.0, %v554
        %556 = vmatprep.mubr.bf16.mxu0 0
        %557 = vmatmul.mubr.bf16.gmra.mxu0 %v365
        %v558 = vpop.f32.mrf.mxu0
        %v559 = vadd.f32 0.0, %v558
        %v560 = vpop.f32.mrf.mxu0
        %v561 = vadd.f32 0.0, %v560
        %v562 = vpop.f32.mrf.mxu0
        %v563 = vadd.f32 0.0, %v562
        %v564 = vpop.f32.mrf.mxu0
        %v565 = vadd.f32 0.0, %v564
        %566 = vdwg.mxu0
        %567 = vst [vmem:[%s276] sm:$0xff] %v489
        %568 = vst [vmem:[%s276 + $0x8] sm:$0xff] %v491
        %569 = vst [vmem:[%s276 + $0x10] sm:$0xff] %v493
        %570 = vst [vmem:[%s276 + $0x18] sm:$0xff] %v495
        %571 = vst [vmem:[%s276 + $0x20] sm:$0xff] %v499
        %572 = vst [vmem:[%s276 + $0x28] sm:$0xff] %v501
        %573 = vst [vmem:[%s276 + $0x30] sm:$0xff] %v503
        %574 = vst [vmem:[%s276 + $0x38] sm:$0xff] %v505
        %575 = vst [vmem:[%s276 + $0x40] sm:$0xff] %v509
        %576 = vst [vmem:[%s276 + $0x48] sm:$0xff] %v511
        %577 = vst [vmem:[%s276 + $0x50] sm:$0xff] %v513
        %578 = vst [vmem:[%s276 + $0x58] sm:$0xff] %v515
        %579 = vst [vmem:[%s276 + $0x60] sm:$0xff] %v519
        %580 = vst [vmem:[%s276 + $0x68] sm:$0xff] %v521
        %581 = vst [vmem:[%s276 + $0x70] sm:$0xff] %v523
        %582 = vst [vmem:[%s276 + $0x78] sm:$0xff] %v525
        %583 = vst [vmem:[%s276 + $0x80] sm:$0xff] %v529
        %584 = vst [vmem:[%s276 + $0x88] sm:$0xff] %v531
        %585 = vst [vmem:[%s276 + $0x90] sm:$0xff] %v533
        %586 = vst [vmem:[%s276 + $0x98] sm:$0xff] %v535
        %587 = vst [vmem:[%s276 + $0xa0] sm:$0xff] %v539
        %588 = vst [vmem:[%s276 + $0xa8] sm:$0xff] %v541
        %589 = vst [vmem:[%s276 + $0xb0] sm:$0xff] %v543
        %590 = vst [vmem:[%s276 + $0xb8] sm:$0xff] %v545
        %591 = vst [vmem:[%s276 + $0xc0] sm:$0xff] %v549
        %592 = vst [vmem:[%s276 + $0xc8] sm:$0xff] %v551
        %593 = vst [vmem:[%s276 + $0xd0] sm:$0xff] %v553
        %594 = vst [vmem:[%s276 + $0xd8] sm:$0xff] %v555
        %595 = vst [vmem:[%s276 + $0xe0] sm:$0xff] %v559
        %596 = vst [vmem:[%s276 + $0xe8] sm:$0xff] %v561
        %597 = vst [vmem:[%s276 + $0xf0] sm:$0xff] %v563
        %598 = vst [vmem:[%s276 + $0xf8] sm:$0xff] %v565
        %v599 = vld [vmem:[#allocation2] sm:$0x3]
        %v600 = vadd.f32 %v489, %v493
        %v601 = vadd.f32 %v600, %v499
        %v602 = vadd.f32 %v601, %v503
        %v603 = vadd.f32 %v602, %v509
        %v604 = vadd.f32 %v603, %v513
        %v605 = vadd.f32 %v604, %v519
        %v606 = vadd.f32 %v605, %v523
        %v607 = vadd.f32 %v606, %v529
        %v608 = vadd.f32 %v607, %v533
        %v609 = vadd.f32 %v608, %v539
        %v610 = vadd.f32 %v609, %v543
        %v611 = vadd.f32 %v610, %v549
        %v612 = vadd.f32 %v611, %v553
        %v613 = vadd.f32 %v612, %v559
        %v614 = vadd.f32 %v613, %v563
        %v615 = vrot.slane %v614, 4
        %v616 = vadd.f32 %v614, %v615
        %v617 = vrot.slane %v616, 2
        %v618 = vadd.f32 %v616, %v617
        %v619 = vrot.slane %v618, 1
        %v620 = vadd.f32 %v618, %v619
        %v621 = vadd.f32 %v491, %v495
        %v622 = vadd.f32 %v621, %v501
        %v623 = vadd.f32 %v622, %v505
        %v624 = vadd.f32 %v623, %v511
        %v625 = vadd.f32 %v624, %v515
        %v626 = vadd.f32 %v625, %v521
        %v627 = vadd.f32 %v626, %v525
        %v628 = vadd.f32 %v627, %v531
        %v629 = vadd.f32 %v628, %v535
        %v630 = vadd.f32 %v629, %v541
        %v631 = vadd.f32 %v630, %v545
        %v632 = vadd.f32 %v631, %v551
        %v633 = vadd.f32 %v632, %v555
        %v634 = vadd.f32 %v633, %v561
        %v635 = vadd.f32 %v634, %v565
        %v636 = vrot.slane %v635, 4
        %v637 = vadd.f32 %v635, %v636
        %v638 = vrot.slane %v637, 2
        %v639 = vadd.f32 %v637, %v638
        %v640 = vrot.slane %v639, 1
        %v641 = vadd.f32 %v639, %v640
        %v644 = vcombine.low %v620, %v641
        %v646 = vunpack.c.l.s4 1966171168
        %v647 = vunpack.c.0.s8 %v646
        %v648 = vlaneseq
        %v649 = vshrl.u32 %v648, 7
        %v650 = vsub.s32 %v647, %v649
        %v651 = vrot.slane %v644, %v650
        %v653 = vunpack.c.l.s4 1966171168
        %v654 = vunpack.c.0.s8 %v653
        %v655 = vlaneseq
        %v656 = vshrl.u32 %v655, 7
        %v657 = vsub.s32 %v654, %v656
        %v658 = vrot.slane %v651, %v657
        %v660 = vadd.f32 %v599, %v658
        %v661 = vlaneseq
        %vm662 = vcmp.ge.s32.totalorder %v661, 0
        %vm663 = vcmp.lt.s32.totalorder %v661, 256
        %vm664 = vmand %vm662, %vm663
        %665 = vst.msk [vmem:[#allocation2] sm:$0x3] %vm664, %v660
        %v666 = vld [vmem:[#allocation3] sm:$0x3]
        %v667 = vmul.f32 %v489, %v489
        %v668 = vmul.f32 %v491, %v491
        %v669 = vmul.f32 %v493, %v493
        %v670 = vmul.f32 %v495, %v495
        %v671 = vmul.f32 %v499, %v499
        %v672 = vmul.f32 %v501, %v501
        %v673 = vmul.f32 %v503, %v503
        %v674 = vmul.f32 %v505, %v505
        %v675 = vmul.f32 %v509, %v509
        %v676 = vmul.f32 %v511, %v511
        %v677 = vmul.f32 %v513, %v513
        %v678 = vmul.f32 %v515, %v515
        %v679 = vmul.f32 %v519, %v519
        %v680 = vmul.f32 %v521, %v521
        %v681 = vmul.f32 %v523, %v523
        %v682 = vmul.f32 %v525, %v525
        %v683 = vmul.f32 %v529, %v529
        %v684 = vmul.f32 %v531, %v531
        %v685 = vmul.f32 %v533, %v533
        %v686 = vmul.f32 %v535, %v535
        %v687 = vmul.f32 %v539, %v539
        %v688 = vmul.f32 %v541, %v541
        %v689 = vmul.f32 %v543, %v543
        %v690 = vmul.f32 %v545, %v545
        %v691 = vmul.f32 %v549, %v549
        %v692 = vmul.f32 %v551, %v551
        %v693 = vmul.f32 %v553, %v553
        %v694 = vmul.f32 %v555, %v555
        %v695 = vmul.f32 %v559, %v559
        %v696 = vmul.f32 %v561, %v561
        %v697 = vmul.f32 %v563, %v563
        %v698 = vmul.f32 %v565, %v565
        %v699 = vadd.f32 %v667, %v669
        %v700 = vadd.f32 %v699, %v671
        %v701 = vadd.f32 %v700, %v673
        %v702 = vadd.f32 %v701, %v675
        %v703 = vadd.f32 %v702, %v677
        %v704 = vadd.f32 %v703, %v679
        %v705 = vadd.f32 %v704, %v681
        %v706 = vadd.f32 %v705, %v683
        %v707 = vadd.f32 %v706, %v685
        %v708 = vadd.f32 %v707, %v687
        %v709 = vadd.f32 %v708, %v689
        %v710 = vadd.f32 %v709, %v691
        %v711 = vadd.f32 %v710, %v693
        %v712 = vadd.f32 %v711, %v695
        %v713 = vadd.f32 %v712, %v697
        %v714 = vrot.slane %v713, 4
        %v715 = vadd.f32 %v713, %v714
        %v716 = vrot.slane %v715, 2
        %v717 = vadd.f32 %v715, %v716
        %v718 = vrot.slane %v717, 1
        %v719 = vadd.f32 %v717, %v718
        %v720 = vadd.f32 %v668, %v670
        %v721 = vadd.f32 %v720, %v672
        %v722 = vadd.f32 %v721, %v674
        %v723 = vadd.f32 %v722, %v676
        %v724 = vadd.f32 %v723, %v678
        %v725 = vadd.f32 %v724, %v680
        %v726 = vadd.f32 %v725, %v682
        %v727 = vadd.f32 %v726, %v684
        %v728 = vadd.f32 %v727, %v686
        %v729 = vadd.f32 %v728, %v688
        %v730 = vadd.f32 %v729, %v690
        %v731 = vadd.f32 %v730, %v692
        %v732 = vadd.f32 %v731, %v694
        %v733 = vadd.f32 %v732, %v696
        %v734 = vadd.f32 %v733, %v698
        %v735 = vrot.slane %v734, 4
        %v736 = vadd.f32 %v734, %v735
        %v737 = vrot.slane %v736, 2
        %v738 = vadd.f32 %v736, %v737
        %v739 = vrot.slane %v738, 1
        %v740 = vadd.f32 %v738, %v739
        %v743 = vcombine.low %v719, %v740
        %v745 = vunpack.c.l.s4 1966171168
        %v746 = vunpack.c.0.s8 %v745
        %v747 = vlaneseq
        %v748 = vshrl.u32 %v747, 7
        %v749 = vsub.s32 %v746, %v748
        %v750 = vrot.slane %v743, %v749
        %v752 = vunpack.c.l.s4 1966171168
        %v753 = vunpack.c.0.s8 %v752
        %v754 = vlaneseq
        %v755 = vshrl.u32 %v754, 7
        %v756 = vsub.s32 %v753, %v755
        %v757 = vrot.slane %v750, %v756
        %v759 = vadd.f32 %v666, %v757
        %760 = vst.msk [vmem:[#allocation3] sm:$0x3] %vm664, %v759
        %p761 = scmp.eq.s32.totalorder %s26, 1
        // Predicated region
        $region49: #{tpu_custom_call.1} parent=35 // pred_check
          %p762 = pneg %p761
        $region50: #{tpu_custom_call.1} parent=35 // pred_check_branch
          %764 = sbr.rel (%p762) target = $region52
        $region51: #{tpu_custom_call.1} parent=35 // pred_region
          %v765 = vld [vmem:[#allocation2] sm:$0x3]
          %v766 = vmul.f32 %v765, 0.00390625
          %v767 = vld [vmem:[#allocation3] sm:$0x3]
          %v768 = vmul.f32 %v767, 0.00390625
          %v769 = vmul.f32 %v766, %v766
          %v770 = vsub.f32 %v768, %v769
          %v771 = vld [vmem:[%s2] sm:$0x3]
          %v772 = vadd.f32 %v770, 1e-05
          %v773 = vrsqrt.pop %v772
          %v774 = vmul.f32 %v771, %v773
          %775 = vst.msk [vmem:[#allocation10] sm:$0x3] %vm664, %v774
          %v776 = vld [vmem:[%s3] sm:$0x3]
          %v777 = vmul.f32 %v766, %v774
          %v778 = vsub.f32 %v776, %v777
          %779 = vst.msk [vmem:[#allocation12] sm:$0x3] %vm664, %v778
        $region52: #{tpu_custom_call.1} parent=35 // pred_fallthru
          _
        %s780 = sand.u32 %s123, 1
        %s781 = scalar_lea.sflag [#allocation6], %s780
        %s782 = sand.u32 %s123, 1
        %s783 = smul.addr %s782, 256
        %s784 = scalar_lea.vmem [#allocation9], %s783
        // Predicated region
        $region53: #{tpu_custom_call.1} parent=35 // pred_check
          %p785 = pneg %p133
        $region54: #{tpu_custom_call.1} parent=35 // pred_check_branch
          %787 = sbr.rel (%p785) target = $region56
        $region55: #{tpu_custom_call.1} parent=35 // pred_region
          %s788 = smul.u32 16, %s26
          %s790 = ssub.s32 4096, 4096
          %791 = vsyncadd %s781, %s790
          %s792 = smul.addr %s788, 2
          %s793 = smul.addr %s792, 128
          %s794 = scalar_lea.hbm %s4, %s793
          %s795 = sshll.u32 %s784, 4
          %s796 = int_to_ptr.vmem [resolvable:$true] %s795
          %801 = dma.vmem_to_hbm [thread:$0]  %s796, 4096, %s794, %s781, 256, 256, 16
        $region56: #{tpu_custom_call.1} parent=35 // pred_fallthru
          _
        // Predicated region
        $region57: #{tpu_custom_call.1} parent=35 // pred_check
          %p802 = pneg %p154
        $region58: #{tpu_custom_call.1} parent=35 // pred_check_branch
          %804 = sbr.rel (%p802) target = $region60
        $region59: #{tpu_custom_call.1} parent=35 // pred_region
          %s806 = ssub.s32 32, 32
          %807 = vsyncadd [#allocation11], %s806
          %s809 = sshll.u32 [#allocation10], 4
          %s810 = int_to_ptr.vmem [resolvable:$true] %s809
          %812 = dma.vmem_to_hbm [thread:$0]  %s810, 32, %s5, [#allocation11]
        $region60: #{tpu_custom_call.1} parent=35 // pred_fallthru
          _
        // Predicated region
        $region61: #{tpu_custom_call.1} parent=35 // pred_check
          %p813 = pneg %p175
        $region62: #{tpu_custom_call.1} parent=35 // pred_check_branch
          %815 = sbr.rel (%p813) target = $region64
        $region63: #{tpu_custom_call.1} parent=35 // pred_region
          %s817 = ssub.s32 32, 32
          %818 = vsyncadd [#allocation11], %s817
          %s820 = sshll.u32 [#allocation12], 4
          %s821 = int_to_ptr.vmem [resolvable:$true] %s820
          %823 = dma.vmem_to_hbm [thread:$0]  %s821, 32, %s6, [#allocation11]
        $region64: #{tpu_custom_call.1} parent=35 // pred_fallthru
          _
        // Predicated region
        $region65: #{tpu_custom_call.1} parent=35 // pred_check
          %p824 = pneg %p154
        $region66: #{tpu_custom_call.1} parent=35 // pred_check_branch
          %826 = sbr.rel (%p824) target = $region68
        $region67: #{tpu_custom_call.1} parent=35 // pred_region
          %827 = dma.done [#allocation11], 32
        $region68: #{tpu_custom_call.1} parent=35 // pred_fallthru
          _
        // Predicated region
        $region69: #{tpu_custom_call.1} parent=35 // pred_check
          %p828 = pneg %p175
        $region70: #{tpu_custom_call.1} parent=35 // pred_check_branch
          %830 = sbr.rel (%p828) target = $region72
        $region71: #{tpu_custom_call.1} parent=35 // pred_region
          %831 = dma.done [#allocation11], 32
        $region72: #{tpu_custom_call.1} parent=35 // pred_fallthru
          _
      $region36: #{tpu_custom_call.1} parent=5 // pred_fallthru
        _
      %p832 = scmp.le.s32.totalorder 2, %s21
      // Predicated region
      $region73: #{tpu_custom_call.1} parent=5 // pred_check
        %p833 = pneg %p832
      $region74: #{tpu_custom_call.1} parent=5 // pred_check_branch
        %835 = sbr.rel (%p833) target = $region76
      $region75: #{tpu_custom_call.1} parent=5 // pred_region
        %s836 = ssub.s32 %s21, 2
        // Predicated region
        $region77: #{tpu_custom_call.1} parent=75 // pred_check
          %p837 = pneg %p139
        $region78: #{tpu_custom_call.1} parent=75 // pred_check_branch
          %839 = sbr.rel (%p837) target = $region80
        $region79: #{tpu_custom_call.1} parent=75 // pred_region
          %s840 = sand.u32 %s124, 1
          %s841 = scalar_lea.sflag [#allocation6], %s840
          %s842 = sand.u32 %s124, 1
          %s843 = smul.addr %s842, 256
          %s844 = scalar_lea.vmem [#allocation9], %s843
          %845 = dma.done %s841, 4096
        $region80: #{tpu_custom_call.1} parent=75 // pred_fallthru
          _
      $region76: #{tpu_custom_call.1} parent=5 // pred_fallthru
        _
    $region6: #{tpu_custom_call.1} parent=1 // loop_footer
      %s25 = sadd.s32 1, %s21
    $region7: #{tpu_custom_call.1} parent=1 // loop_footer_branch
      %20 = sbr.rel target = $region3
    $region8: #{tpu_custom_call.1} parent=1 // loop_exit
      _
    %846 = vsyncpa [#allocation5], 1
    %s847 = scalar_lea.sflag [#allocation5], 1
    %848 = vsyncpa %s847, 1
    %849 = vsyncpa [#allocation8], 1
    %850 = vsyncpa [#allocation6], 1
    %s851 = scalar_lea.sflag [#allocation6], 1
    %852 = vsyncpa %s851, 1
    %853 = vsyncpa [#allocation11], 1

</llo_original>
